<compile_context>
chip_gen: v7x
topology: tpu7x:2x2x1
jax: 0.10.0
libtpu: 0.0.40
codegen_flags: <defaults>
</compile_context>

<pallas_src>
import math

import jax
import jax.numpy as jnp
from jax.experimental import pallas as pl
from jax.experimental.pallas import tpu as pltpu


def make_sinusoidal_pe(max_len: int, d_model: int, dtype=jnp.float32) -> jnp.ndarray:
    """Build the (max_len, 1, d_model) sinusoidal buffer, exactly as in __init__."""
    position = jnp.arange(0, max_len, dtype=jnp.float32)[:, None]             # (L, 1)
    div_term = jnp.exp(
        jnp.arange(0, d_model, 2, dtype=jnp.float32) * (-math.log(10000.0) / d_model)
    )                                                                          # (D/2,)
    pe = jnp.zeros((max_len, d_model), dtype=jnp.float32)
    pe = pe.at[:, 0::2].set(jnp.sin(position * div_term))
    pe = pe.at[:, 1::2].set(jnp.cos(position * div_term))
    # pe.unsqueeze(0).transpose(0, 1) -> (max_len, 1, d_model)
    return pe[:, None, :].astype(dtype)


def _pe_kernel_factory(dropout_rate: float, training: bool):
    """Returns kernel(seed_ref, x_ref, pe_ref, o_ref) on (ts, B, D) / (ts, 1, D) tiles."""
    p = float(dropout_rate)
    apply_dropout = bool(training) and p > 0.0
    drop_all = apply_dropout and p >= 1.0
    if apply_dropout and not drop_all:
        # uint32 threshold: drop iff hash < round(p * 2^32)  =>  P(keep) = 1 - p
        thr_u32 = min(int(round(p * 4294967296.0)), 4294967295)
        keep_scale = 1.0 / (1.0 - p)

    def kernel(seed_ref, x_ref, pe_ref, o_ref):
        # pe block is (ts, 1, D): implicit broadcast over the batch (sublane) axis.
        # Compute natively in the I/O dtype (bf16 on v6e/v7x; v5e upcasts itself).
        y = x_ref[...] + pe_ref[...]

        if apply_dropout:
            if drop_all:
                y = jnp.zeros_like(y)
            else:
                ts, b, d = y.shape
                # Global element index, unique across the whole (S, B, D) tensor.
                row0 = (pl.program_id(0) * ts).astype(jnp.uint32)
                r = jax.lax.broadcasted_iota(jnp.uint32, y.shape, 0) + row0
                bi = jax.lax.broadcasted_iota(jnp.uint32, y.shape, 1)
                di = jax.lax.broadcasted_iota(jnp.uint32, y.shape, 2)
                lin = (r * jnp.uint32(b) + bi) * jnp.uint32(d) + di
                # Mix the seed non-linearly (golden-ratio constant), then apply the
                # lowbias32 avalanche finalizer. Pure VPU work, hidden under the DMA.
                h = lin ^ (seed_ref[0].astype(jnp.uint32) * jnp.uint32(0x9E3779B1))
                h = h ^ (h >> 16)
                h = h * jnp.uint32(0x7FEB352D)
                h = h ^ (h >> 15)
                h = h * jnp.uint32(0x846CA68B)
                h = h ^ (h >> 16)
                keep = h >= jnp.uint32(thr_u32)
                y = jnp.where(keep, y * keep_scale, 0.0)

        o_ref[...] = y.astype(o_ref.dtype)

    return kernel


def _choose_tile_rows(seq_len: int, row_bytes: int,
                      target_bytes: int = 8 * 1024 * 1024) -> int:
    """Rows per block: ~8 MiB of x per tile, multiple of 8, >=2 blocks when S>=16."""
    rows = max(8, target_bytes // max(row_bytes, 1))
    rows = max(8, (rows // 8) * 8)
    if seq_len >= 16:
        # v7x megacore: keep at least two sequence blocks so both TCs get work.
        half = -(-seq_len // 2)                 # ceil(S / 2)
        half = ((half + 7) // 8) * 8            # round up to sublane multiple
        rows = min(rows, half)
    return min(rows, seq_len)


def positional_encoding_forward(x, pe, *, dropout_rate=0.1, training=False, seed=0):
    """
    x   : (seq_len, batch, d_model), f32 or bf16
    pe  : (max_len, 1, d_model) buffer (precompute one per dtype and reuse)
    returns dropout(x + pe[:seq_len]) with the same shape/dtype as x
    """
    S, B, D = x.shape
    if pe.ndim == 2:                      # accept (max_len, d_model) too
        pe = pe[:, None, :]
    assert pe.shape[0] >= S and pe.shape[2] == D, "pe buffer too small for input"
    if pe.dtype != x.dtype:
        # Cache a per-dtype pe buffer at module init to avoid this per-call cast.
        pe = pe.astype(x.dtype)

    itemsize = jnp.dtype(x.dtype).itemsize
    ts = _choose_tile_rows(S, B * D * itemsize)
    grid = (pl.cdiv(S, ts),)

    seed_arr = jnp.asarray([seed], dtype=jnp.int32)
    kernel = _pe_kernel_factory(float(dropout_rate), bool(training))

    grid_spec = pltpu.PrefetchScalarGridSpec(
        num_scalar_prefetch=1,                                    # seed -> SMEM
        grid=grid,
        in_specs=[
            pl.BlockSpec((ts, B, D), lambda i, seed_ref: (i, 0, 0)),   # x tile
            pl.BlockSpec((ts, 1, D), lambda i, seed_ref: (i, 0, 0)),   # pe tile (no batch tiling)
        ],
        out_specs=pl.BlockSpec((ts, B, D), lambda i, seed_ref: (i, 0, 0)),
    )

    return pl.pallas_call(
        kernel,
        out_shape=jax.ShapeDtypeStruct((S, B, D), x.dtype),
        grid_spec=grid_spec,
        compiler_params=pltpu.CompilerParams(
            dimension_semantics=("parallel",),      # shard seq blocks across v7x TCs
            vmem_limit_bytes=48 * 1024 * 1024,      # 2 streams x 2 bufs x ~8 MiB + pe, < 64 MiB
        ),
    )(seed_arr, x, pe)


if __name__ == "__main__":
    # Small shapes consistent with the module's forward: x: (seq, batch, d_model)
    SEQ, BATCH, D_MODEL, MAX_LEN = 8, 2, 32, 64

    key = jax.random.PRNGKey(0)
    x = jax.random.normal(key, (SEQ, BATCH, D_MODEL), dtype=jnp.float32)
    pe_f32 = make_sinusoidal_pe(MAX_LEN, D_MODEL)                  # (MAX_LEN, 1, D)
    y_ref = x + pe_f32[:SEQ]

    # 1) Eval-mode forward (dropout is identity), matching module.eval().
    y = positional_encoding_forward(x, pe_f32, dropout_rate=0.1, training=False)
    y = jax.block_until_ready(y)
    assert y.shape == x.shape and y.dtype == x.dtype
    assert jnp.allclose(y, y_ref, atol=1e-6), "eval-mode mismatch vs reference"

    # 2) bf16 I/O path (native bf16 compute; pe cached per dtype).
    pe_bf16 = make_sinusoidal_pe(MAX_LEN, D_MODEL, dtype=jnp.bfloat16)
    y_bf = positional_encoding_forward(x.astype(jnp.bfloat16), pe_bf16,
                                       dropout_rate=0.1, training=False)
    y_bf = jax.block_until_ready(y_bf)
    assert jnp.allclose(y_bf.astype(jnp.float32), y_ref, atol=5e-2, rtol=5e-2), \
        "bf16 eval-mode mismatch vs reference"

    # 3) Training-mode smoke test: every element is either 0 (dropped) or
    #    y_ref / (1 - p) (kept, inverted-dropout scaling).
    p = 0.1
    y_tr = positional_encoding_forward(x, pe_f32, dropout_rate=p,
                                       training=True, seed=123)
    y_tr = jax.block_until_ready(y_tr)
    scaled = y_ref / (1.0 - p)
    is_zero = jnp.isclose(y_tr, 0.0, atol=1e-6)
    is_scaled = jnp.isclose(y_tr, scaled, atol=1e-5, rtol=1e-5)
    assert bool(jnp.all(is_zero | is_scaled)), "dropout output not in {0, x/(1-p)}"
    zero_frac = float(jnp.mean(is_zero.astype(jnp.float32)))
    assert 0.0 < zero_frac < 0.5, "dropout drop fraction implausible for p=0.1"

    # TODO(synk): training-mode dropout uses a counter-based hash RNG, so its mask
    # differs bit-for-bit from torch.nn.Dropout's RNG stream (distributionally
    # equivalent, not numerically identical).

    print("KERNEL_OK")
</pallas_src>

<mosaic_0001>
module attributes {stable_mosaic.version = 11 : i64} {
  func.func @kernel(%arg0: i32, %arg1: memref<1xi32, #tpu.memory_space<smem>>, %arg2: memref<8x2x32xf32, #tpu.memory_space<vmem>>, %arg3: memref<8x1x32xf32, #tpu.memory_space<vmem>>, %arg4: memref<8x2x32xf32, #tpu.memory_space<vmem>>) attributes {dimension_semantics = [#tpu.dimension_semantics<parallel>], iteration_bounds = array<i64: 1>, scalar_prefetch = 1 : i64, scratch_operands = 0 : i64, tpu.core_type = #tpu.core_type<tc>, window_params = [{transform_indices = @transform_0, window_bounds = array<i64: 8, 2, 32>}, {transform_indices = @transform_1, window_bounds = array<i64: 8, 1, 32>}, {transform_indices = @transform_2, window_bounds = array<i64: 8, 2, 32>}]} {
    %c0 = arith.constant 0 : index
    %c0_0 = arith.constant 0 : index
    %c0_1 = arith.constant 0 : index
    %0 = vector.load %arg2[%c0, %c0_0, %c0_1] : memref<8x2x32xf32, #tpu.memory_space<vmem>>, vector<8x2x32xf32>
    %c0_2 = arith.constant 0 : index
    %c0_3 = arith.constant 0 : index
    %c0_4 = arith.constant 0 : index
    %1 = vector.load %arg3[%c0_2, %c0_3, %c0_4] : memref<8x1x32xf32, #tpu.memory_space<vmem>>, vector<8x1x32xf32>
    %2 = vector.broadcast %1 : vector<8x1x32xf32> to vector<8x2x32xf32>
    %3 = arith.addf %0, %2 : vector<8x2x32xf32>
    %c0_5 = arith.constant 0 : index
    %c0_6 = arith.constant 0 : index
    %c0_7 = arith.constant 0 : index
    %4 = vector.load %arg4[%c0_5, %c0_6, %c0_7] : memref<8x2x32xf32, #tpu.memory_space<vmem>>, vector<8x2x32xf32>
    tpu.vector_store %arg4[%c0_5, %c0_6, %c0_7], %3 {strides = array<i32>} : memref<8x2x32xf32, #tpu.memory_space<vmem>>, vector<8x2x32xf32>,
    return
  }
  func.func @transform_0(%arg0: i32, %arg1: memref<1xi32, #tpu.memory_space<smem>>) -> (i32, i32, i32) {
    %c0_i32 = arith.constant 0 : i32
    %c0_i32_0 = arith.constant 0 : i32
    %c0_i32_1 = arith.constant 0 : i32
    return %arg0, %c0_i32, %c0_i32_0 : i32, i32, i32
  }
  func.func @transform_1(%arg0: i32, %arg1: memref<1xi32, #tpu.memory_space<smem>>) -> (i32, i32, i32) {
    %c0_i32 = arith.constant 0 : i32
    %c0_i32_0 = arith.constant 0 : i32
    %c0_i32_1 = arith.constant 0 : i32
    return %arg0, %c0_i32, %c0_i32_0 : i32, i32, i32
  }
  func.func @transform_2(%arg0: i32, %arg1: memref<1xi32, #tpu.memory_space<smem>>) -> (i32, i32, i32) {
    %c0_i32 = arith.constant 0 : i32
    %c0_i32_0 = arith.constant 0 : i32
    %c0_i32_1 = arith.constant 0 : i32
    return %arg0, %c0_i32, %c0_i32_0 : i32, i32, i32
  }
}

</mosaic_0001>

<llo_original>
// kernel: tpu_custom_call.1
$region0: #{tpu_custom_call.1}
  #allocation0 [shape = 'u32[]', space=smem, size = 0x4, offset = 0x4, fixed_abs, tag = 'smem constant byte address 0x4 - core index']
  #allocation1 [shape = 'u32[144,128]{1,0:T(1,128)}', space=vmem, size = 0x12000, scoped, tag = 'internal scratch']
  #allocation2 [shape = 's32[1]{0}', space=sflag, size = 0x4, scoped, tag = 'scoped memory for tpu_custom_call.1']
  #allocation3 [shape = 's32[1]{0:T(128)S(6)}', space=smem, size = 0x200, scoped, tag = 'prefetched SMEM operand 0']
  %s0 = inlined_call_operand.<no memory space> [shape: s32[1], index: 0, kind: input, shape index: {}]
  %s1 = inlined_call_operand.vmem [shape: f32[8,2,32], index: 1, kind: input, shape index: {}]
  %s2 = inlined_call_operand.vmem [shape: f32[64,1,32], index: 2, kind: input, shape index: {}]
  %s3 = inlined_call_operand.hbm [shape: f32[8,2,32], index: 3, kind: output, shape index: {}]
  %s4 = sld [smem:[#allocation0]]
  $region18: #{tpu_custom_call.1} parent=0
    _
  %s6 = ssub.s32 1, %s4
  %s7 = scalar_select 0, %s6, %s4
  %8 = sst [smem:[#allocation3]] %s0
  $region1: #{tpu_custom_call.1} parent=0
    #allocation4 [shape = 'u8[8192]{0}', space=vmem, size = 0x2000, scoped, tag = 'output window, operand 0, single buffered']
    #allocation5 [shape = 's32[1]{0}', space=sflag, size = 0x4, scoped, tag = 'scoped memory for tpu_custom_call.1']
    %9 = vsyncpa [#allocation5], 0
    // Predicated region
    $region2: #{tpu_custom_call.1} parent=1 // pred_check
      _
    $region3: #{tpu_custom_call.1} parent=1 // pred_check_branch
      %11 = sbr.rel (0) target = $region5
    $region4: #{tpu_custom_call.1} parent=1 // pred_region
      _
    $region5: #{tpu_custom_call.1} parent=1 // pred_fallthru
      _
    // Predicated region
    $region6: #{tpu_custom_call.1} parent=1 // pred_check
      _
    $region7: #{tpu_custom_call.1} parent=1 // pred_check_branch
      %13 = sbr.rel (0) target = $region9
    $region8: #{tpu_custom_call.1} parent=1 // pred_region
      _
    $region9: #{tpu_custom_call.1} parent=1 // pred_fallthru
      _
    %v14 = vld [vmem:[%s1] sm:$0x3]
    %v15 = vld [vmem:[%s1 + $0x2] sm:$0x3]
    %v16 = vld [vmem:[%s1 + $0x4] sm:$0x3]
    %v17 = vld [vmem:[%s1 + $0x6] sm:$0x3]
    %v18 = vld [vmem:[%s1 + $0x8] sm:$0x3]
    %v19 = vld [vmem:[%s1 + $0xa] sm:$0x3]
    %v20 = vld [vmem:[%s1 + $0xc] sm:$0x3]
    %v21 = vld [vmem:[%s1 + $0xe] sm:$0x3]
    %v22 = vld [vmem:[%s2] sm:$0x1]
    %v23 = vld [vmem:[%s2 + $0x1] sm:$0x1]
    %v24 = vld [vmem:[%s2 + $0x2] sm:$0x1]
    %v25 = vld [vmem:[%s2 + $0x3] sm:$0x1]
    %v26 = vld [vmem:[%s2 + $0x4] sm:$0x1]
    %v27 = vld [vmem:[%s2 + $0x5] sm:$0x1]
    %v28 = vld [vmem:[%s2 + $0x6] sm:$0x1]
    %v29 = vld [vmem:[%s2 + $0x7] sm:$0x1]
    %v38 = vlaneseq
    %v39 = vshrl.u32 %v38, 7
    %v40 = vsub.s32 0, %v39
    %v41 = vrot.slane %v22, %v40
    %v42 = vlaneseq
    %v43 = vshrl.u32 %v42, 7
    %v44 = vsub.s32 0, %v43
    %v45 = vrot.slane %v23, %v44
    %v46 = vlaneseq
    %v47 = vshrl.u32 %v46, 7
    %v48 = vsub.s32 0, %v47
    %v49 = vrot.slane %v24, %v48
    %v50 = vlaneseq
    %v51 = vshrl.u32 %v50, 7
    %v52 = vsub.s32 0, %v51
    %v53 = vrot.slane %v25, %v52
    %v54 = vlaneseq
    %v55 = vshrl.u32 %v54, 7
    %v56 = vsub.s32 0, %v55
    %v57 = vrot.slane %v26, %v56
    %v58 = vlaneseq
    %v59 = vshrl.u32 %v58, 7
    %v60 = vsub.s32 0, %v59
    %v61 = vrot.slane %v27, %v60
    %v62 = vlaneseq
    %v63 = vshrl.u32 %v62, 7
    %v64 = vsub.s32 0, %v63
    %v65 = vrot.slane %v28, %v64
    %v66 = vlaneseq
    %v67 = vshrl.u32 %v66, 7
    %v68 = vsub.s32 0, %v67
    %v69 = vrot.slane %v29, %v68
    %v78 = vadd.f32 %v14, %v41
    %v79 = vadd.f32 %v15, %v45
    %v80 = vadd.f32 %v16, %v49
    %v81 = vadd.f32 %v17, %v53
    %v82 = vadd.f32 %v18, %v57
    %v83 = vadd.f32 %v19, %v61
    %v84 = vadd.f32 %v20, %v65
    %v85 = vadd.f32 %v21, %v69
    %vm86 = vcmask 254976
    %87 = vst.msk [vmem:[#allocation4] sm:$0x3] %vm86, %v78
    %88 = vst.msk [vmem:[#allocation4 + $0x2] sm:$0x3] %vm86, %v79
    %89 = vst.msk [vmem:[#allocation4 + $0x4] sm:$0x3] %vm86, %v80
    %90 = vst.msk [vmem:[#allocation4 + $0x6] sm:$0x3] %vm86, %v81
    %91 = vst.msk [vmem:[#allocation4 + $0x8] sm:$0x3] %vm86, %v82
    %92 = vst.msk [vmem:[#allocation4 + $0xa] sm:$0x3] %vm86, %v83
    %93 = vst.msk [vmem:[#allocation4 + $0xc] sm:$0x3] %vm86, %v84
    %94 = vst.msk [vmem:[#allocation4 + $0xe] sm:$0x3] %vm86, %v85
    // Predicated region
    $region10: #{tpu_custom_call.1} parent=1 // pred_check
      _
    $region11: #{tpu_custom_call.1} parent=1 // pred_check_branch
      %96 = sbr.rel (0) target = $region13
    $region12: #{tpu_custom_call.1} parent=1 // pred_region
      %s98 = ssub.s32 256, 256
      %99 = vsyncadd [#allocation5], %s98
      %s100 = sshll.u32 [#allocation4], 4
      %s101 = int_to_ptr.vmem [resolvable:$true] %s100
      %106 = dma.vmem_to_hbm [thread:$0]  %s101, 256, %s3, [#allocation5], 32, 32, 2
    $region13: #{tpu_custom_call.1} parent=1 // pred_fallthru
      _
    // Predicated region
    $region14: #{tpu_custom_call.1} parent=1 // pred_check
      _
    $region15: #{tpu_custom_call.1} parent=1 // pred_check_branch
      %108 = sbr.rel (0) target = $region17
    $region16: #{tpu_custom_call.1} parent=1 // pred_region
      %109 = dma.done [#allocation5], 256
    $region17: #{tpu_custom_call.1} parent=1 // pred_fallthru
      _
    %110 = vsyncpa [#allocation5], 1

</llo_original>
